<compile_context>
chip_gen: v6e
topology: v6e:2x2x1
jax: 0.10.0
libtpu: 0.0.40
codegen_flags: <defaults>
</compile_context>

<pallas_src>
import functools

import jax
import jax.numpy as jnp
from jax.experimental import pallas as pl
from jax.experimental.pallas import tpu as pltpu

LANE = 128
HIDDEN_PAD = 128   # hidden widths 20 / 10 / 20 all padded to one lane-dense width


def _ceil_to(n, m):
    return -(-n // m) * m


def _fc4_chunk(m_pad):
    """Lane-chunk width for fc4: ~512 lanes, static unroll count capped ~16."""
    return min(m_pad, max(512, _ceil_to(-(-m_pad // 16), LANE)))


# --------------------------------------------------------------------------- #
# Kernel
# --------------------------------------------------------------------------- #
def sae_kernel(x_ref, w1_ref, b1_ref, w2_ref, b2_ref,
               w3_ref, b3_ref, w4_ref, b4_ref, o_ref):
    """One (tb, m_pad) batch tile through the whole (padded) SAE.

    Matmuls accumulate in f32 (preferred_element_type); sigmoids run in f32
    (required on v5e).  fc4 runs in lane chunks so the live f32 temporary is
    (tb, chunk) instead of (tb, m_pad) and output stores stream early.
    """
    x = x_ref[...]
    h1 = jax.nn.sigmoid(
        jnp.dot(x, w1_ref[...], preferred_element_type=jnp.float32) + b1_ref[...])
    h2 = jax.nn.sigmoid(
        jnp.dot(h1, w2_ref[...], preferred_element_type=jnp.float32) + b2_ref[...])
    h3 = jax.nn.sigmoid(
        jnp.dot(h2, w3_ref[...], preferred_element_type=jnp.float32) + b3_ref[...])
    h3c = h3.astype(w4_ref.dtype)

    m_pad = o_ref.shape[-1]
    cn = _fc4_chunk(m_pad)
    for start in range(0, m_pad, cn):          # static slices -> zero-cost views
        sl = slice(start, min(start + cn, m_pad))
        out = (jnp.dot(h3c, w4_ref[:, sl], preferred_element_type=jnp.float32)
               + b4_ref[:, sl])
        o_ref[:, sl] = out.astype(o_ref.dtype)


# --------------------------------------------------------------------------- #
# Capability probes / sizing helpers
# --------------------------------------------------------------------------- #
@functools.lru_cache(maxsize=None)
def _single_buffer_supported():
    """True iff this Pallas accepts BlockSpec(pipeline_mode=pl.Buffered(1)).
    Probed ONCE by lowering (not executing) a trivial kernel."""
    if not hasattr(pl, "Buffered"):
        return False
    try:
        def k(x_ref, o_ref):
            o_ref[...] = x_ref[...]
        call = pl.pallas_call(
            k,
            out_shape=jax.ShapeDtypeStruct((8, LANE), jnp.float32),
            grid=(1,),
            in_specs=[pl.BlockSpec((8, LANE), lambda i: (0, 0),
                                   pipeline_mode=pl.Buffered(1))],
            out_specs=pl.BlockSpec((8, LANE), lambda i: (0, 0)),
        )
        jax.jit(call).lower(jax.ShapeDtypeStruct((8, LANE), jnp.float32))
        return True
    except Exception:   # pure perf-feature probe: any failure just disables it
        return False


@functools.lru_cache(maxsize=None)
def _vmem_capacity_bytes():
    """Per-core VMEM capacity (128 MiB on v5e/v6e, 64 MiB on v7x)."""
    try:
        cap = int(pltpu.get_tpu_info().vmem_capacity_bytes)
        if cap > 0:
            return cap
    except Exception:
        pass
    return 64 << 20      # conservative fallback: safe on every generation


def _weight_vmem_bytes(m_pad, itemsize, n_buf):
    w14 = 2 * m_pad * HIDDEN_PAD * itemsize          # w1 + w4 (compute dtype)
    w23 = 2 * HIDDEN_PAD * HIDDEN_PAD * 4            # w2 + w3 (f32)
    biases = 8 * (3 * HIDDEN_PAD + m_pad) * 4        # (1, .) blocks pad to 8 sublanes
    return n_buf * (w14 + w23 + biases)


def _pick_tb(batch, m_pad, itemsize, row_align, weight_vmem, vmem_budget, parallel):
    """Batch-tile rows sized by BYTES: DMA sweet spot ~8 MiB of x+out per grid
    step, capped by the VMEM that remains after resident weights, double-
    buffered tiles and f32 intermediates.  No fixed row cap."""
    b_al = _ceil_to(batch, row_align)
    per_row_tile = 2 * m_pad * itemsize                           # x row + out row
    per_row_vmem = 2 * per_row_tile + (3 * HIDDEN_PAD + _fc4_chunk(m_pad)) * 4
    avail = vmem_budget - weight_vmem - (4 << 20)                 # scratch headroom
    tb_vmem = avail // per_row_vmem if avail > 0 else row_align
    tb_dma = (8 << 20) // per_row_tile
    tb = max(row_align, min(tb_vmem, tb_dma, b_al))
    if parallel and b_al >= 4 * row_align:
        # v7x megacore: keep >= 2 grid steps per core (>= 4 total) so each core
        # still overlaps input DMA / compute / output writeback.
        tb = min(tb, _ceil_to(-(-b_al // 4), row_align))
    return max(row_align, (tb // row_align) * row_align)


# --------------------------------------------------------------------------- #
# Parameter preparation (exact zero padding, done once per model)
# --------------------------------------------------------------------------- #
def _pad2(a, shape):
    out = jnp.zeros(shape, a.dtype)
    return out.at[: a.shape[0], : a.shape[1]].set(a)


def _prepare_params(params, m_pad, compute_dtype):
    """Zero-pad to lane-dense shapes.  Exact: padded weight ROWS are zero, so
    the sigmoid(0)=0.5 values in padded hidden lanes never reach the output,
    and padded output columns are exactly 0 (sliced off outside the kernel).
    w1/w4 stream in compute_dtype; the tiny w2/w3/biases stay f32."""
    h = HIDDEN_PAD
    w1 = _pad2(params["w1"], (m_pad, h)).astype(compute_dtype)
    b1 = _pad2(params["b1"], (1, h)).astype(jnp.float32)
    w2 = _pad2(params["w2"], (h, h)).astype(jnp.float32)
    b2 = _pad2(params["b2"], (1, h)).astype(jnp.float32)
    w3 = _pad2(params["w3"], (h, h)).astype(jnp.float32)
    b3 = _pad2(params["b3"], (1, h)).astype(jnp.float32)
    w4 = _pad2(params["w4"], (h, m_pad)).astype(compute_dtype)
    b4 = _pad2(params["b4"], (1, m_pad)).astype(jnp.float32)
    return w1, b1, w2, b2, w3, b3, w4, b4


# --------------------------------------------------------------------------- #
# Jitted forward (pad x -> pallas_call -> slice), built per trace shape
# --------------------------------------------------------------------------- #
@jax.jit
def _sae_apply(x, w1, b1, w2, b2, w3, b3, w4, b4):
    batch, m = x.shape
    m_pad = w1.shape[0]
    compute_dtype = w1.dtype
    itemsize = jnp.dtype(compute_dtype).itemsize
    row_align = 8 if itemsize >= 4 else 16              # sublane packing for bf16

    single_buf = _single_buffer_supported()
    n_wbuf = 1 if single_buf else 2

    vmem_cap = _vmem_capacity_bytes()                    # generation-aware
    vmem_budget = max(32 << 20, int(0.75 * vmem_cap))    # ~96 MiB v5e/v6e, ~48 MiB v7x

    weight_vmem = _weight_vmem_bytes(m_pad, itemsize, n_wbuf)

    # Megacore heuristic: with the batch axis "parallel", each v7x core DMAs
    # the full resident w1/w4 independently.  Only shard the batch when x+out
    # HBM traffic dominates the (duplicated) weight traffic.
    w14_hbm = 2 * m_pad * HIDDEN_PAD * itemsize
    x_out_hbm = 2 * _ceil_to(batch, row_align) * m_pad * itemsize
    parallel = x_out_hbm >= 2 * w14_hbm
    semantics = ("parallel",) if parallel else ("arbitrary",)

    tb = _pick_tb(batch, m_pad, itemsize, row_align, weight_vmem,
                  vmem_budget, parallel)
    b_pad = _ceil_to(batch, tb)

    def const_spec(shape):
        # Constant index_map -> block DMA'd once; single-buffer it (when
        # supported) so the saved VMEM buys a bigger batch tile.
        if single_buf:
            return pl.BlockSpec(shape, lambda i: (0, 0),
                                pipeline_mode=pl.Buffered(1))
        return pl.BlockSpec(shape, lambda i: (0, 0))

    weight_arrs = (w1, b1, w2, b2, w3, b3, w4, b4)
    in_specs = [pl.BlockSpec((tb, m_pad), lambda i: (i, 0))]
    in_specs += [const_spec(w.shape) for w in weight_arrs]

    w_hbm = w14_hbm + 2 * HIDDEN_PAD * HIDDEN_PAD * 4 + (3 * HIDDEN_PAD + m_pad) * 4
    cost = pl.CostEstimate(
        flops=int(2 * b_pad * (2 * m_pad * HIDDEN_PAD + 2 * HIDDEN_PAD * HIDDEN_PAD)),
        transcendentals=int(3 * b_pad * HIDDEN_PAD),
        bytes_accessed=int(2 * b_pad * m_pad * itemsize + w_hbm),
    )

    call = pl.pallas_call(
        sae_kernel,
        out_shape=jax.ShapeDtypeStruct((b_pad, m_pad), compute_dtype),
        grid_spec=pltpu.PrefetchScalarGridSpec(
            num_scalar_prefetch=0,
            grid=(b_pad // tb,),
            in_specs=in_specs,
            out_specs=pl.BlockSpec((tb, m_pad), lambda i: (i, 0)),
        ),
        compiler_params=pltpu.CompilerParams(
            dimension_semantics=semantics,
            vmem_limit_bytes=int(vmem_budget),
        ),
        cost_estimate=cost,
    )

    if batch == b_pad and m == m_pad and x.dtype == compute_dtype:
        x_p = x
    else:
        x_p = jnp.zeros((b_pad, m_pad), compute_dtype).at[:batch, :m].set(
            x.astype(compute_dtype))

    out_p = call(x_p, *weight_arrs)
    if batch == b_pad and m == m_pad:
        return out_p
    return out_p[:batch, :m]


def make_sae_forward(params, *, compute_dtype=jnp.bfloat16):
    """Build an SAE forward for fixed params.  Weights are zero-padded and cast
    ONCE here (not per call); the returned callable runs pad + kernel + slice
    under a single jit.  compute_dtype controls only the HBM-streamed operands
    (x, w1, w4, output); accumulation and sigmoids stay float32."""
    nb_movies = params["w1"].shape[0]
    m_pad = _ceil_to(nb_movies, LANE)
    weights = _prepare_params(params, m_pad, compute_dtype)
    _single_buffer_supported()      # prime the probe cache outside jit tracing
    # TODO(synk): for very large nb_movies (w1/w4 no longer VMEM-resident on
    # v7x), add an M grid axis: fc1 as an "arbitrary" reduction into a VMEM h1
    # accumulator, fc4/output over parallel M blocks.

    def fwd(x):
        return _sae_apply(x, *weights)
    return fwd


def sae_forward(x, params, *, compute_dtype=jnp.bfloat16):
    """One-shot convenience wrapper (prefer make_sae_forward in a loop)."""
    return make_sae_forward(params, compute_dtype=compute_dtype)(x)


# --------------------------------------------------------------------------- #
# Parameter init + pure-JAX reference
# --------------------------------------------------------------------------- #
def init_params(key, nb_movies):
    """U(-1/sqrt(fan_in), 1/sqrt(fan_in)) init mirroring nn.Linear.
    Weights stored as (in_features, out_features); biases as (1, out)."""
    dims = [(nb_movies, 20), (20, 10), (10, 20), (20, nb_movies)]
    params = {}
    for idx, (fan_in, fan_out) in enumerate(dims, start=1):
        key, kw, kb = jax.random.split(key, 3)
        bound = 1.0 / float(fan_in) ** 0.5
        params[f"w{idx}"] = jax.random.uniform(
            kw, (fan_in, fan_out), jnp.float32, -bound, bound)
        params[f"b{idx}"] = jax.random.uniform(
            kb, (1, fan_out), jnp.float32, -bound, bound)
    return params


def sae_reference(x, params, compute_dtype=jnp.float32):
    """Pure-JAX reference mirroring the kernel's dtype handling (f32 acc)."""
    cd = compute_dtype
    h = jax.nn.sigmoid(
        jnp.dot(x.astype(cd), params["w1"].astype(cd),
                preferred_element_type=jnp.float32) + params["b1"])
    h = jax.nn.sigmoid(
        jnp.dot(h, params["w2"], preferred_element_type=jnp.float32) + params["b2"])
    h = jax.nn.sigmoid(
        jnp.dot(h, params["w3"], preferred_element_type=jnp.float32) + params["b3"])
    out = jnp.dot(h.astype(cd), params["w4"].astype(cd),
                  preferred_element_type=jnp.float32) + params["b4"]
    return out.astype(cd)


# --------------------------------------------------------------------------- #
# Demo / correctness check
# --------------------------------------------------------------------------- #
if __name__ == "__main__":
    # Small synthetic shapes; nb_movies deliberately NOT a multiple of 128 to
    # exercise the lane-padding path.
    NB_MOVIES = 200
    BATCH = 64

    key = jax.random.PRNGKey(0)
    kx, kp = jax.random.split(key)
    x = jax.random.uniform(kx, (BATCH, NB_MOVIES), jnp.float32, 0.0, 5.0)
    params = init_params(kp, NB_MOVIES)

    # Default bf16-streaming path (halves HBM traffic, f32 accumulation).
    fwd_bf16 = make_sae_forward(params, compute_dtype=jnp.bfloat16)
    out_bf16 = jax.block_until_ready(fwd_bf16(x))
    ref_bf16 = sae_reference(x, params, compute_dtype=jnp.bfloat16)
    assert out_bf16.shape == (BATCH, NB_MOVIES)
    assert jnp.allclose(out_bf16.astype(jnp.float32),
                        ref_bf16.astype(jnp.float32), atol=5e-2, rtol=5e-2)

    # float32 path: same semantics as the PyTorch module.  Tolerance is loose
    # because neither side pins MXU f32 matmul precision to HIGHEST.
    fwd_f32 = make_sae_forward(params, compute_dtype=jnp.float32)
    out_f32 = jax.block_until_ready(fwd_f32(x))
    ref_f32 = sae_reference(x, params, compute_dtype=jnp.float32)
    assert out_f32.shape == (BATCH, NB_MOVIES)
    assert jnp.allclose(out_f32, ref_f32, atol=5e-2, rtol=5e-2)

    print("KERNEL_OK")
</pallas_src>

<mosaic_0001>
module attributes {stable_mosaic.version = 11 : i64} {
  func.func @sae_kernel(%arg0: i32, %arg1: memref<64x256xbf16, #tpu.memory_space<vmem>>, %arg2: memref<256x128xbf16, #tpu.memory_space<vmem>>, %arg3: memref<1x128xf32, #tpu.memory_space<vmem>>, %arg4: memref<128x128xf32, #tpu.memory_space<vmem>>, %arg5: memref<1x128xf32, #tpu.memory_space<vmem>>, %arg6: memref<128x128xf32, #tpu.memory_space<vmem>>, %arg7: memref<1x128xf32, #tpu.memory_space<vmem>>, %arg8: memref<128x256xbf16, #tpu.memory_space<vmem>>, %arg9: memref<1x256xf32, #tpu.memory_space<vmem>>, %arg10: memref<64x256xbf16, #tpu.memory_space<vmem>>) attributes {dimension_semantics = [#tpu.dimension_semantics<arbitrary>], iteration_bounds = array<i64: 1>, scalar_prefetch = 0 : i64, scratch_operands = 0 : i64, tpu.core_type = #tpu.core_type<tc>, window_params = [{transform_indices = @transform_0, window_bounds = array<i64: 64, 256>}, {pipeline_mode = #tpu.pipeline_mode<synchronous>, transform_indices = @transform_1, window_bounds = array<i64: 256, 128>}, {pipeline_mode = #tpu.pipeline_mode<synchronous>, transform_indices = @transform_2, window_bounds = array<i64: 1, 128>}, {pipeline_mode = #tpu.pipeline_mode<synchronous>, transform_indices = @transform_3, window_bounds = array<i64: 128, 128>}, {pipeline_mode = #tpu.pipeline_mode<synchronous>, transform_indices = @transform_4, window_bounds = array<i64: 1, 128>}, {pipeline_mode = #tpu.pipeline_mode<synchronous>, transform_indices = @transform_5, window_bounds = array<i64: 128, 128>}, {pipeline_mode = #tpu.pipeline_mode<synchronous>, transform_indices = @transform_6, window_bounds = array<i64: 1, 128>}, {pipeline_mode = #tpu.pipeline_mode<synchronous>, transform_indices = @transform_7, window_bounds = array<i64: 128, 256>}, {pipeline_mode = #tpu.pipeline_mode<synchronous>, transform_indices = @transform_8, window_bounds = array<i64: 1, 256>}, {transform_indices = @transform_9, window_bounds = array<i64: 64, 256>}]} {
    %c0 = arith.constant 0 : index
    %c0_0 = arith.constant 0 : index
    %0 = vector.load %arg1[%c0, %c0_0] : memref<64x256xbf16, #tpu.memory_space<vmem>>, vector<64x256xbf16>
    %c0_1 = arith.constant 0 : index
    %c0_2 = arith.constant 0 : index
    %1 = vector.load %arg2[%c0_1, %c0_2] : memref<256x128xbf16, #tpu.memory_space<vmem>>, vector<256x128xbf16>
    %cst = arith.constant dense<0.000000e+00> : vector<64x128xf32>
    %2 = tpu.matmul %0, %1, %cst {dimension_numbers = #tpu.dot_dimension_numbers<[1], [0], [0], [1], [0, 0, 1, 1], [], []>} : vector<64x256xbf16>, vector<256x128xbf16>, vector<64x128xf32> -> vector<64x128xf32>
    %c0_3 = arith.constant 0 : index
    %c0_4 = arith.constant 0 : index
    %3 = vector.load %arg3[%c0_3, %c0_4] : memref<1x128xf32, #tpu.memory_space<vmem>>, vector<1x128xf32>
    %4 = vector.broadcast %3 : vector<1x128xf32> to vector<64x128xf32>
    %5 = arith.addf %2, %4 : vector<64x128xf32>
    %6 = arith.negf %5 : vector<64x128xf32>
    %7 = math.exp %6 : vector<64x128xf32>
    %cst_5 = arith.constant 1.000000e+00 : f32
    %8 = vector.broadcast %cst_5 : f32 to vector<64x128xf32>
    %9 = arith.addf %8, %7 : vector<64x128xf32>
    %10 = arith.divf %8, %9 : vector<64x128xf32>
    %c0_6 = arith.constant 0 : index
    %c0_7 = arith.constant 0 : index
    %11 = vector.load %arg4[%c0_6, %c0_7] : memref<128x128xf32, #tpu.memory_space<vmem>>, vector<128x128xf32>
    %cst_8 = arith.constant dense<0.000000e+00> : vector<64x128xf32>
    %12 = tpu.matmul %10, %11, %cst_8 {dimension_numbers = #tpu.dot_dimension_numbers<[1], [0], [0], [1], [0, 0, 1, 1], [], []>} : vector<64x128xf32>, vector<128x128xf32>, vector<64x128xf32> -> vector<64x128xf32>
    %c0_9 = arith.constant 0 : index
    %c0_10 = arith.constant 0 : index
    %13 = vector.load %arg5[%c0_9, %c0_10] : memref<1x128xf32, #tpu.memory_space<vmem>>, vector<1x128xf32>
    %14 = vector.broadcast %13 : vector<1x128xf32> to vector<64x128xf32>
    %15 = arith.addf %12, %14 : vector<64x128xf32>
    %16 = arith.negf %15 : vector<64x128xf32>
    %17 = math.exp %16 : vector<64x128xf32>
    %cst_11 = arith.constant 1.000000e+00 : f32
    %18 = vector.broadcast %cst_11 : f32 to vector<64x128xf32>
    %19 = arith.addf %18, %17 : vector<64x128xf32>
    %20 = arith.divf %18, %19 : vector<64x128xf32>
    %c0_12 = arith.constant 0 : index
    %c0_13 = arith.constant 0 : index
    %21 = vector.load %arg6[%c0_12, %c0_13] : memref<128x128xf32, #tpu.memory_space<vmem>>, vector<128x128xf32>
    %cst_14 = arith.constant dense<0.000000e+00> : vector<64x128xf32>
    %22 = tpu.matmul %20, %21, %cst_14 {dimension_numbers = #tpu.dot_dimension_numbers<[1], [0], [0], [1], [0, 0, 1, 1], [], []>} : vector<64x128xf32>, vector<128x128xf32>, vector<64x128xf32> -> vector<64x128xf32>
    %c0_15 = arith.constant 0 : index
    %c0_16 = arith.constant 0 : index
    %23 = vector.load %arg7[%c0_15, %c0_16] : memref<1x128xf32, #tpu.memory_space<vmem>>, vector<1x128xf32>
    %24 = vector.broadcast %23 : vector<1x128xf32> to vector<64x128xf32>
    %25 = arith.addf %22, %24 : vector<64x128xf32>
    %26 = arith.negf %25 : vector<64x128xf32>
    %27 = math.exp %26 : vector<64x128xf32>
    %cst_17 = arith.constant 1.000000e+00 : f32
    %28 = vector.broadcast %cst_17 : f32 to vector<64x128xf32>
    %29 = arith.addf %28, %27 : vector<64x128xf32>
    %30 = arith.divf %28, %29 : vector<64x128xf32>
    %31 = arith.truncf %30 : vector<64x128xf32> to vector<64x128xbf16>
    %c0_18 = arith.constant 0 : index
    %c0_19 = arith.constant 0 : index
    %32 = vector.load %arg8[%c0_18, %c0_19] : memref<128x256xbf16, #tpu.memory_space<vmem>>, vector<128x256xbf16>
    %cst_20 = arith.constant dense<0.000000e+00> : vector<64x256xf32>
    %33 = tpu.matmul %31, %32, %cst_20 {dimension_numbers = #tpu.dot_dimension_numbers<[1], [0], [0], [1], [0, 0, 1, 1], [], []>} : vector<64x128xbf16>, vector<128x256xbf16>, vector<64x256xf32> -> vector<64x256xf32>
    %c0_21 = arith.constant 0 : index
    %c0_22 = arith.constant 0 : index
    %34 = vector.load %arg9[%c0_21, %c0_22] : memref<1x256xf32, #tpu.memory_space<vmem>>, vector<1x256xf32>
    %35 = vector.broadcast %34 : vector<1x256xf32> to vector<64x256xf32>
    %36 = arith.addf %33, %35 : vector<64x256xf32>
    %37 = arith.truncf %36 : vector<64x256xf32> to vector<64x256xbf16>
    %c0_23 = arith.constant 0 : index
    %c0_24 = arith.constant 0 : index
    %38 = vector.load %arg10[%c0_23, %c0_24] : memref<64x256xbf16, #tpu.memory_space<vmem>>, vector<64x256xbf16>
    tpu.vector_store %arg10[%c0_23, %c0_24], %37 {strides = array<i32>} : memref<64x256xbf16, #tpu.memory_space<vmem>>, vector<64x256xbf16>,
    return
  }
  func.func @transform_0(%arg0: i32) -> (i32, i32) {
    %c0_i32 = arith.constant 0 : i32
    %c0_i32_0 = arith.constant 0 : i32
    return %arg0, %c0_i32 : i32, i32
  }
  func.func @transform_1(%arg0: i32) -> (i32, i32) {
    %c0_i32 = arith.constant 0 : i32
    %c0_i32_0 = arith.constant 0 : i32
    %c0_i32_1 = arith.constant 0 : i32
    return %c0_i32, %c0_i32_0 : i32, i32
  }
  func.func @transform_2(%arg0: i32) -> (i32, i32) {
    %c0_i32 = arith.constant 0 : i32
    %c0_i32_0 = arith.constant 0 : i32
    %c0_i32_1 = arith.constant 0 : i32
    return %c0_i32, %c0_i32_0 : i32, i32
  }
  func.func @transform_3(%arg0: i32) -> (i32, i32) {
    %c0_i32 = arith.constant 0 : i32
    %c0_i32_0 = arith.constant 0 : i32
    %c0_i32_1 = arith.constant 0 : i32
    return %c0_i32, %c0_i32_0 : i32, i32
  }
  func.func @transform_4(%arg0: i32) -> (i32, i32) {
    %c0_i32 = arith.constant 0 : i32
    %c0_i32_0 = arith.constant 0 : i32
    %c0_i32_1 = arith.constant 0 : i32
    return %c0_i32, %c0_i32_0 : i32, i32
  }
  func.func @transform_5(%arg0: i32) -> (i32, i32) {
    %c0_i32 = arith.constant 0 : i32
    %c0_i32_0 = arith.constant 0 : i32
    %c0_i32_1 = arith.constant 0 : i32
    return %c0_i32, %c0_i32_0 : i32, i32
  }
  func.func @transform_6(%arg0: i32) -> (i32, i32) {
    %c0_i32 = arith.constant 0 : i32
    %c0_i32_0 = arith.constant 0 : i32
    %c0_i32_1 = arith.constant 0 : i32
    return %c0_i32, %c0_i32_0 : i32, i32
  }
  func.func @transform_7(%arg0: i32) -> (i32, i32) {
    %c0_i32 = arith.constant 0 : i32
    %c0_i32_0 = arith.constant 0 : i32
    %c0_i32_1 = arith.constant 0 : i32
    return %c0_i32, %c0_i32_0 : i32, i32
  }
  func.func @transform_8(%arg0: i32) -> (i32, i32) {
    %c0_i32 = arith.constant 0 : i32
    %c0_i32_0 = arith.constant 0 : i32
    %c0_i32_1 = arith.constant 0 : i32
    return %c0_i32, %c0_i32_0 : i32, i32
  }
  func.func @transform_9(%arg0: i32) -> (i32, i32) {
    %c0_i32 = arith.constant 0 : i32
    %c0_i32_0 = arith.constant 0 : i32
    return %arg0, %c0_i32 : i32, i32
  }
}

</mosaic_0001>

<llo_original>
// kernel: _sae_apply.1
$region0: #{_sae_apply.1}
  #allocation0 [shape = 'u32[]', space=smem, size = 0x4, offset = 0x4, fixed_abs, tag = 'smem constant byte address 0x4 - core index']
  #allocation1 [shape = 'u32[144,128]{1,0:T(1,128)}', space=vmem, size = 0x12000, scoped, tag = 'internal scratch']
  %s0 = inlined_call_operand.vmem [shape: bf16[64,256], index: 0, kind: input, shape index: {}]
  %s1 = inlined_call_operand.vmem [shape: bf16[256,128], index: 1, kind: input, shape index: {}]
  %s2 = inlined_call_operand.vmem [shape: f32[1,128], index: 2, kind: input, shape index: {}]
  %s3 = inlined_call_operand.vmem [shape: f32[128,128], index: 3, kind: input, shape index: {}]
  %s4 = inlined_call_operand.vmem [shape: f32[1,128], index: 4, kind: input, shape index: {}]
  %s5 = inlined_call_operand.hbm [shape: f32[128,128], index: 5, kind: input, shape index: {}]
  %s6 = inlined_call_operand.vmem [shape: f32[1,128], index: 6, kind: input, shape index: {}]
  %s7 = inlined_call_operand.hbm [shape: bf16[128,256], index: 7, kind: input, shape index: {}]
  %s8 = inlined_call_operand.vmem [shape: f32[1,256], index: 8, kind: input, shape index: {}]
  %s9 = inlined_call_operand.hbm [shape: bf16[64,256], index: 9, kind: output, shape index: {}]
  %s10 = sld [smem:[#allocation0]]
  $region54: #{_sae_apply.1} parent=0
    _
  %s12 = ssub.s32 1, %s10
  %s13 = scalar_select 0, %s12, %s10
  $region1: #{_sae_apply.1} parent=0
    #allocation2 [shape = 'u8[65536]{0}', space=vmem, size = 0x10000, scoped, tag = 'input window, operand 5, single buffered']
    #allocation3 [shape = 's32[1]{0}', space=sflag, size = 0x4, scoped, tag = 'scoped memory for _sae_apply.1']
    #allocation4 [shape = 's32[1]{0}', space=sflag, size = 0x4, scoped, tag = 'scoped memory for _sae_apply.1']
    #allocation5 [shape = 'u8[65536]{0}', space=vmem, size = 0x10000, scoped, tag = 'input window, operand 7, single buffered']
    #allocation6 [shape = 's32[1]{0}', space=sflag, size = 0x4, scoped, tag = 'scoped memory for _sae_apply.1']
    #allocation7 [shape = 'u8[32768]{0}', space=vmem, size = 0x8000, scoped, tag = 'output window, operand 0, single buffered']
    %14 = vsyncpa [#allocation3], 0
    %15 = vsyncpa [#allocation6], 0
    %16 = vsyncpa [#allocation4], 0
    // Predicated region
    $region2: #{_sae_apply.1} parent=1 // pred_check
      _
    $region3: #{_sae_apply.1} parent=1 // pred_check_branch
      %18 = sbr.rel (0) target = $region5
    $region4: #{_sae_apply.1} parent=1 // pred_region
      _
    $region5: #{_sae_apply.1} parent=1 // pred_fallthru
      _
    // Predicated region
    $region6: #{_sae_apply.1} parent=1 // pred_check
      _
    $region7: #{_sae_apply.1} parent=1 // pred_check_branch
      %20 = sbr.rel (0) target = $region9
    $region8: #{_sae_apply.1} parent=1 // pred_region
      _
    $region9: #{_sae_apply.1} parent=1 // pred_fallthru
      _
    // Predicated region
    $region10: #{_sae_apply.1} parent=1 // pred_check
      _
    $region11: #{_sae_apply.1} parent=1 // pred_check_branch
      %22 = sbr.rel (0) target = $region13
    $region12: #{_sae_apply.1} parent=1 // pred_region
      _
    $region13: #{_sae_apply.1} parent=1 // pred_fallthru
      _
    // Predicated region
    $region14: #{_sae_apply.1} parent=1 // pred_check
      _
    $region15: #{_sae_apply.1} parent=1 // pred_check_branch
      %24 = sbr.rel (0) target = $region17
    $region16: #{_sae_apply.1} parent=1 // pred_region
      _
    $region17: #{_sae_apply.1} parent=1 // pred_fallthru
      _
    // Predicated region
    $region18: #{_sae_apply.1} parent=1 // pred_check
      _
    $region19: #{_sae_apply.1} parent=1 // pred_check_branch
      %26 = sbr.rel (0) target = $region21
    $region20: #{_sae_apply.1} parent=1 // pred_region
      _
    $region21: #{_sae_apply.1} parent=1 // pred_fallthru
      _
    // Predicated region
    $region22: #{_sae_apply.1} parent=1 // pred_check
      _
    $region23: #{_sae_apply.1} parent=1 // pred_check_branch
      %28 = sbr.rel (0) target = $region25
    $region24: #{_sae_apply.1} parent=1 // pred_region
      %s30 = ssub.s32 2048, 2048
      %31 = vsyncadd [#allocation3], %s30
      %s32 = sshll.u32 [#allocation2], 4
      %s33 = int_to_ptr.vmem [resolvable:$true] %s32
      %38 = dma.hbm_to_vmem [thread:$0]  %s5, 2048, %s33, [#allocation3], 128, 128, 8
    $region25: #{_sae_apply.1} parent=1 // pred_fallthru
      _
    // Predicated region
    $region26: #{_sae_apply.1} parent=1 // pred_check
      _
    $region27: #{_sae_apply.1} parent=1 // pred_check_branch
      %40 = sbr.rel (0) target = $region29
    $region28: #{_sae_apply.1} parent=1 // pred_region
      _
    $region29: #{_sae_apply.1} parent=1 // pred_fallthru
      _
    // Predicated region
    $region30: #{_sae_apply.1} parent=1 // pred_check
      _
    $region31: #{_sae_apply.1} parent=1 // pred_check_branch
      %42 = sbr.rel (0) target = $region33
    $region32: #{_sae_apply.1} parent=1 // pred_region
      %s44 = ssub.s32 2048, 2048
      %45 = vsyncadd [#allocation6], %s44
      %s46 = sshll.u32 [#allocation5], 4
      %s47 = int_to_ptr.vmem [resolvable:$true] %s46
      %52 = dma.hbm_to_vmem [thread:$0]  %s7, 2048, %s47, [#allocation6], 128, 128, 8
    $region33: #{_sae_apply.1} parent=1 // pred_fallthru
      _
    // Predicated region
    $region34: #{_sae_apply.1} parent=1 // pred_check
      _
    $region35: #{_sae_apply.1} parent=1 // pred_check_branch
      %54 = sbr.rel (0) target = $region37
    $region36: #{_sae_apply.1} parent=1 // pred_region
      _
    $region37: #{_sae_apply.1} parent=1 // pred_fallthru
      _
    // Predicated region
    $region38: #{_sae_apply.1} parent=1 // pred_check
      _
    $region39: #{_sae_apply.1} parent=1 // pred_check_branch
      %56 = sbr.rel (0) target = $region41
    $region40: #{_sae_apply.1} parent=1 // pred_region
      %57 = dma.done [#allocation3], 2048
    $region41: #{_sae_apply.1} parent=1 // pred_fallthru
      _
    // Predicated region
    $region42: #{_sae_apply.1} parent=1 // pred_check
      _
    $region43: #{_sae_apply.1} parent=1 // pred_check_branch
      %59 = sbr.rel (0) target = $region45
    $region44: #{_sae_apply.1} parent=1 // pred_region
      %60 = dma.done [#allocation6], 2048
    $region45: #{_sae_apply.1} parent=1 // pred_fallthru
      _
    %v62 = vld [vmem:[%s0] sm:$0xff]
    %v63 = vld [vmem:[%s0 + $0x8] sm:$0xff]
    %v64 = vld [vmem:[%s0 + $0x10] sm:$0xff]
    %v65 = vld [vmem:[%s0 + $0x18] sm:$0xff]
    %v66 = vld [vmem:[%s0 + $0x20] sm:$0xff]
    %v67 = vld [vmem:[%s0 + $0x28] sm:$0xff]
    %v68 = vld [vmem:[%s0 + $0x30] sm:$0xff]
    %v69 = vld [vmem:[%s0 + $0x38] sm:$0xff]
    %v70 = vld [vmem:[%s1] sm:$0xf]
    %v71 = vld [vmem:[%s1 + $0x4] sm:$0xf]
    %v72 = vld [vmem:[%s1 + $0x8] sm:$0xf]
    %v73 = vld [vmem:[%s1 + $0xc] sm:$0xf]
    %v74 = vld [vmem:[%s1 + $0x10] sm:$0xf]
    %v75 = vld [vmem:[%s1 + $0x14] sm:$0xf]
    %v76 = vld [vmem:[%s1 + $0x18] sm:$0xf]
    %v77 = vld [vmem:[%s1 + $0x1c] sm:$0xf]
    %v78 = vld [vmem:[%s1 + $0x20] sm:$0xf]
    %v79 = vld [vmem:[%s1 + $0x24] sm:$0xf]
    %v80 = vld [vmem:[%s1 + $0x28] sm:$0xf]
    %v81 = vld [vmem:[%s1 + $0x2c] sm:$0xf]
    %v82 = vld [vmem:[%s1 + $0x30] sm:$0xf]
    %v83 = vld [vmem:[%s1 + $0x34] sm:$0xf]
    %v84 = vld [vmem:[%s1 + $0x38] sm:$0xf]
    %v85 = vld [vmem:[%s1 + $0x3c] sm:$0xf]
    %v86 = vld [vmem:[%s1 + $0x40] sm:$0xf]
    %v87 = vld [vmem:[%s1 + $0x44] sm:$0xf]
    %v88 = vld [vmem:[%s1 + $0x48] sm:$0xf]
    %v89 = vld [vmem:[%s1 + $0x4c] sm:$0xf]
    %v90 = vld [vmem:[%s1 + $0x50] sm:$0xf]
    %v91 = vld [vmem:[%s1 + $0x54] sm:$0xf]
    %v92 = vld [vmem:[%s1 + $0x58] sm:$0xf]
    %v93 = vld [vmem:[%s1 + $0x5c] sm:$0xf]
    %v94 = vld [vmem:[%s1 + $0x60] sm:$0xf]
    %v95 = vld [vmem:[%s1 + $0x64] sm:$0xf]
    %v96 = vld [vmem:[%s1 + $0x68] sm:$0xf]
    %v97 = vld [vmem:[%s1 + $0x6c] sm:$0xf]
    %v98 = vld [vmem:[%s1 + $0x70] sm:$0xf]
    %v99 = vld [vmem:[%s1 + $0x74] sm:$0xf]
    %v100 = vld [vmem:[%s1 + $0x78] sm:$0xf]
    %v101 = vld [vmem:[%s1 + $0x7c] sm:$0xf]
    %v102 = vld [vmem:[%s2] sm:$0x1]
    %v104 = vlaneseq
    %v105 = vshrl.u32 %v104, 7
    %v106 = vsub.s32 0, %v105
    %v107 = vrot.slane %v102, %v106
    %v117 = vunpack.c.l.b16 %v62
    %v118 = vunpack.c.h.b16 %v62
    %v119 = vunpack.c.l.b16 %v63
    %v120 = vunpack.c.h.b16 %v63
    %v121 = vunpack.c.l.b16 %v64
    %v122 = vunpack.c.h.b16 %v64
    %v123 = vunpack.c.l.b16 %v65
    %v124 = vunpack.c.h.b16 %v65
    %v125 = vunpack.c.l.b16 %v66
    %v126 = vunpack.c.h.b16 %v66
    %v127 = vunpack.c.l.b16 %v67
    %v128 = vunpack.c.h.b16 %v67
    %v129 = vunpack.c.l.b16 %v68
    %v130 = vunpack.c.h.b16 %v68
    %v131 = vunpack.c.l.b16 %v69
    %v132 = vunpack.c.h.b16 %v69
    %v133 = vpack.c.b16 %v119, %v117
    %v134 = vpack.c.b16 %v120, %v118
    %v135 = vpack.c.b16 %v123, %v121
    %v136 = vpack.c.b16 %v124, %v122
    %v137 = vpack.c.b16 %v127, %v125
    %v138 = vpack.c.b16 %v128, %v126
    %v139 = vpack.c.b16 %v131, %v129
    %v140 = vpack.c.b16 %v132, %v130
    %v181 = vunpack.c.l.b16 %v70
    %v182 = vunpack.c.l.b16 %v71
    %v183 = vunpack.c.l.b16 %v72
    %v184 = vunpack.c.l.b16 %v73
    %v185 = vunpack.c.l.b16 %v74
    %v186 = vunpack.c.l.b16 %v75
    %v187 = vunpack.c.l.b16 %v76
    %v188 = vunpack.c.l.b16 %v77
    %v189 = vunpack.c.l.b16 %v78
    %v190 = vunpack.c.l.b16 %v79
    %v191 = vunpack.c.l.b16 %v80
    %v192 = vunpack.c.l.b16 %v81
    %v193 = vunpack.c.l.b16 %v82
    %v194 = vunpack.c.l.b16 %v83
    %v195 = vunpack.c.l.b16 %v84
    %v196 = vunpack.c.l.b16 %v85
    %v197 = vunpack.c.l.b16 %v86
    %v198 = vunpack.c.l.b16 %v87
    %v199 = vunpack.c.l.b16 %v88
    %v200 = vunpack.c.l.b16 %v89
    %v201 = vunpack.c.l.b16 %v90
    %v202 = vunpack.c.l.b16 %v91
    %v203 = vunpack.c.l.b16 %v92
    %v204 = vunpack.c.l.b16 %v93
    %v205 = vunpack.c.l.b16 %v94
    %v206 = vunpack.c.l.b16 %v95
    %v207 = vunpack.c.l.b16 %v96
    %v208 = vunpack.c.l.b16 %v97
    %v209 = vunpack.c.l.b16 %v98
    %v210 = vunpack.c.l.b16 %v99
    %v211 = vunpack.c.l.b16 %v100
    %v212 = vunpack.c.l.b16 %v101
    %v213 = vpack.c.b16 %v182, %v181
    %v214 = vpack.c.b16 %v184, %v183
    %v215 = vpack.c.b16 %v186, %v185
    %v216 = vpack.c.b16 %v188, %v187
    %v217 = vpack.c.b16 %v190, %v189
    %v218 = vpack.c.b16 %v192, %v191
    %v219 = vpack.c.b16 %v194, %v193
    %v220 = vpack.c.b16 %v196, %v195
    %v221 = vpack.c.b16 %v198, %v197
    %v222 = vpack.c.b16 %v200, %v199
    %v223 = vpack.c.b16 %v202, %v201
    %v224 = vpack.c.b16 %v204, %v203
    %v225 = vpack.c.b16 %v206, %v205
    %v226 = vpack.c.b16 %v208, %v207
    %v227 = vpack.c.b16 %v210, %v209
    %v228 = vpack.c.b16 %v212, %v211
    %245 = vmatprep.subr.bf16.mxu0 0
    %246 = vmatpush1.bf16.msra.mxu0 %v220
    %247 = vmatprep.subr.bf16.mxu0 0
    %248 = vmatpush1.bf16.msra.mxu0 %v219
    %249 = vmatprep.subr.bf16.mxu0 0
    %250 = vmatpush1.bf16.msra.mxu0 %v218
    %251 = vmatprep.subr.bf16.mxu0 0
    %252 = vmatpush1.bf16.msra.mxu0 %v217
    %253 = vmatprep.subr.bf16.mxu0 0
    %254 = vmatpush1.bf16.msra.mxu0 %v216
    %255 = vmatprep.subr.bf16.mxu0 0
    %256 = vmatpush1.bf16.msra.mxu0 %v215
    %257 = vmatprep.subr.bf16.mxu0 0
    %258 = vmatpush1.bf16.msra.mxu0 %v214
    %259 = vmatprep.subr.bf16.mxu0 0
    %260 = vmatpush1.bf16.msra.mxu0 %v213
    %261 = vmatprep.subr.bf16.mxu0 0
    %262 = vmatpush2.bf16.msra.mxu0 %v228
    %263 = vmatprep.subr.bf16.mxu0 0
    %264 = vmatpush2.bf16.msra.mxu0 %v227
    %265 = vmatprep.subr.bf16.mxu0 0
    %266 = vmatpush2.bf16.msra.mxu0 %v226
    %267 = vmatprep.subr.bf16.mxu0 0
    %268 = vmatpush2.bf16.msra.mxu0 %v225
    %269 = vmatprep.subr.bf16.mxu0 0
    %270 = vmatpush2.bf16.msra.mxu0 %v224
    %271 = vmatprep.subr.bf16.mxu0 0
    %272 = vmatpush2.bf16.msra.mxu0 %v223
    %273 = vmatprep.subr.bf16.mxu0 0
    %274 = vmatpush2.bf16.msra.mxu0 %v222
    %275 = vmatprep.subr.bf16.mxu0 0
    %276 = vmatpush2.bf16.msra.mxu0 %v221
    %277 = vmatprep.mubr.bf16.mxu0 %v134
    %278 = vmatmul.mubr.bf16.gmra.mxu0 %v133
    %v279 = vpop.f32.mrf.mxu0
    %v280 = vadd.f32 %v107, %v279
    %v281 = vpop.f32.mrf.mxu0
    %v282 = vpop.f32.mrf.mxu0
    %v283 = vadd.f32 %v107, %v282
    %v284 = vpop.f32.mrf.mxu0
    %285 = vmatprep.mubr.bf16.mxu0 %v136
    %286 = vmatmul.mubr.bf16.gmra.mxu0 %v135
    %v287 = vpop.f32.mrf.mxu0
    %v288 = vadd.f32 %v107, %v287
    %v289 = vpop.f32.mrf.mxu0
    %v290 = vpop.f32.mrf.mxu0
    %v291 = vadd.f32 %v107, %v290
    %v292 = vpop.f32.mrf.mxu0
    %293 = vmatprep.mubr.bf16.mxu0 %v138
    %294 = vmatmul.mubr.bf16.gmra.mxu0 %v137
    %v295 = vpop.f32.mrf.mxu0
    %v296 = vadd.f32 %v107, %v295
    %v297 = vpop.f32.mrf.mxu0
    %v298 = vpop.f32.mrf.mxu0
    %v299 = vadd.f32 %v107, %v298
    %v300 = vpop.f32.mrf.mxu0
    %301 = vmatprep.mubr.bf16.mxu0 %v140
    %302 = vmatmul.mubr.bf16.gmra.mxu0 %v139
    %v303 = vpop.f32.mrf.mxu0
    %v304 = vadd.f32 %v107, %v303
    %v305 = vpop.f32.mrf.mxu0
    %v306 = vpop.f32.mrf.mxu0
    %v307 = vadd.f32 %v107, %v306
    %v308 = vpop.f32.mrf.mxu0
    %309 = vdwg.mxu0
    %v310 = vxor.u32 %v280, 2147483648
    %v311 = vxor.u32 %v283, 2147483648
    %v312 = vxor.u32 %v288, 2147483648
    %v313 = vxor.u32 %v291, 2147483648
    %v314 = vxor.u32 %v296, 2147483648
    %v315 = vxor.u32 %v299, 2147483648
    %v316 = vxor.u32 %v304, 2147483648
    %v317 = vxor.u32 %v307, 2147483648
    %v318 = vmul.f32 %v310, 1.442695
    %v319 = vpow.pop %v318
    %v320 = vmul.f32 %v311, 1.442695
    %v321 = vpow.pop %v320
    %v322 = vmul.f32 %v312, 1.442695
    %v323 = vpow.pop %v322
    %v324 = vmul.f32 %v313, 1.442695
    %v325 = vpow.pop %v324
    %v326 = vmul.f32 %v314, 1.442695
    %v327 = vpow.pop %v326
    %v328 = vmul.f32 %v315, 1.442695
    %v329 = vpow.pop %v328
    %v330 = vmul.f32 %v316, 1.442695
    %v331 = vpow.pop %v330
    %v332 = vmul.f32 %v317, 1.442695
    %v333 = vpow.pop %v332
    %v334 = vadd.f32 %v319, 1.0
    %v335 = vadd.f32 %v321, 1.0
    %v336 = vadd.f32 %v323, 1.0
    %v337 = vadd.f32 %v325, 1.0
    %v338 = vadd.f32 %v327, 1.0
    %v339 = vadd.f32 %v329, 1.0
    %v340 = vadd.f32 %v331, 1.0
    %v341 = vadd.f32 %v333, 1.0
    %v342 = vrcp.pop %v334
    %v343 = vmul.f32 1.0, %v342
    %v344 = vrcp.pop %v335
    %v345 = vmul.f32 1.0, %v344
    %v346 = vrcp.pop %v336
    %v347 = vmul.f32 1.0, %v346
    %v348 = vrcp.pop %v337
    %v349 = vmul.f32 1.0, %v348
    %v350 = vrcp.pop %v338
    %v351 = vmul.f32 1.0, %v350
    %v352 = vrcp.pop %v339
    %v353 = vmul.f32 1.0, %v352
    %v354 = vrcp.pop %v340
    %v355 = vmul.f32 1.0, %v354
    %v356 = vrcp.pop %v341
    %v357 = vmul.f32 1.0, %v356
    %v358 = vld [vmem:[%s3] sm:$0xff]
    %v359 = vld [vmem:[%s3 + $0x8] sm:$0xff]
    %v360 = vld [vmem:[%s3 + $0x10] sm:$0xff]
    %v361 = vld [vmem:[%s3 + $0x18] sm:$0xff]
    %v362 = vld [vmem:[%s3 + $0x20] sm:$0xff]
    %v363 = vld [vmem:[%s3 + $0x28] sm:$0xff]
    %v364 = vld [vmem:[%s3 + $0x30] sm:$0xff]
    %v365 = vld [vmem:[%s3 + $0x38] sm:$0xff]
    %v366 = vld [vmem:[%s3 + $0x40] sm:$0xff]
    %v367 = vld [vmem:[%s3 + $0x48] sm:$0xff]
    %v368 = vld [vmem:[%s3 + $0x50] sm:$0xff]
    %v369 = vld [vmem:[%s3 + $0x58] sm:$0xff]
    %v370 = vld [vmem:[%s3 + $0x60] sm:$0xff]
    %v371 = vld [vmem:[%s3 + $0x68] sm:$0xff]
    %v372 = vld [vmem:[%s3 + $0x70] sm:$0xff]
    %v373 = vld [vmem:[%s3 + $0x78] sm:$0xff]
    %v374 = vld [vmem:[%s4] sm:$0x1]
    %v376 = vlaneseq
    %v377 = vshrl.u32 %v376, 7
    %v378 = vsub.s32 0, %v377
    %v379 = vrot.slane %v374, %v378
    %381 = vmatprep.subr.mxu0 0.0
    %382 = vmatpush1.msra.mxu0 %v373
    %383 = vmatprep.subr.mxu0 0.0
    %384 = vmatpush1.msra.mxu0 %v372
    %385 = vmatprep.subr.mxu0 0.0
    %386 = vmatpush1.msra.mxu0 %v371
    %387 = vmatprep.subr.mxu0 0.0
    %388 = vmatpush1.msra.mxu0 %v370
    %389 = vmatprep.subr.mxu0 0.0
    %390 = vmatpush1.msra.mxu0 %v369
    %391 = vmatprep.subr.mxu0 0.0
    %392 = vmatpush1.msra.mxu0 %v368
    %393 = vmatprep.subr.mxu0 0.0
    %394 = vmatpush1.msra.mxu0 %v367
    %395 = vmatprep.subr.mxu0 0.0
    %396 = vmatpush1.msra.mxu0 %v366
    %397 = vmatprep.subr.mxu0 0.0
    %398 = vmatpush1.msra.mxu0 %v365
    %399 = vmatprep.subr.mxu0 0.0
    %400 = vmatpush1.msra.mxu0 %v364
    %401 = vmatprep.subr.mxu0 0.0
    %402 = vmatpush1.msra.mxu0 %v363
    %403 = vmatprep.subr.mxu0 0.0
    %404 = vmatpush1.msra.mxu0 %v362
    %405 = vmatprep.subr.mxu0 0.0
    %406 = vmatpush1.msra.mxu0 %v361
    %407 = vmatprep.subr.mxu0 0.0
    %408 = vmatpush1.msra.mxu0 %v360
    %409 = vmatprep.subr.mxu0 0.0
    %410 = vmatpush1.msra.mxu0 %v359
    %411 = vmatprep.subr.mxu0 0.0
    %412 = vmatpush1.msra.mxu0 %v358
    %413 = vmatprep.subr.mxu0 0.0
    %414 = vmatpush2.msra.mxu0 0.0
    %415 = vmatprep.subr.mxu0 0.0
    %416 = vmatpush2.msra.mxu0 0.0
    %417 = vmatprep.subr.mxu0 0.0
    %418 = vmatpush2.msra.mxu0 0.0
    %419 = vmatprep.subr.mxu0 0.0
    %420 = vmatpush2.msra.mxu0 0.0
    %421 = vmatprep.subr.mxu0 0.0
    %422 = vmatpush2.msra.mxu0 0.0
    %423 = vmatprep.subr.mxu0 0.0
    %424 = vmatpush2.msra.mxu0 0.0
    %425 = vmatprep.subr.mxu0 0.0
    %426 = vmatpush2.msra.mxu0 0.0
    %427 = vmatprep.subr.mxu0 0.0
    %428 = vmatpush2.msra.mxu0 0.0
    %429 = vmatprep.subr.mxu0 0.0
    %430 = vmatpush2.msra.mxu0 0.0
    %431 = vmatprep.subr.mxu0 0.0
    %432 = vmatpush2.msra.mxu0 0.0
    %433 = vmatprep.subr.mxu0 0.0
    %434 = vmatpush2.msra.mxu0 0.0
    %435 = vmatprep.subr.mxu0 0.0
    %436 = vmatpush2.msra.mxu0 0.0
    %437 = vmatprep.subr.mxu0 0.0
    %438 = vmatpush2.msra.mxu0 0.0
    %439 = vmatprep.subr.mxu0 0.0
    %440 = vmatpush2.msra.mxu0 0.0
    %441 = vmatprep.subr.mxu0 0.0
    %442 = vmatpush2.msra.mxu0 0.0
    %443 = vmatprep.subr.mxu0 0.0
    %444 = vmatpush2.msra.mxu0 0.0
    %445 = vmatprep.mubr.f32.mxu0 0.0
    %446 = vmatmul.mubr.f32.gmra.mxu0 %v343
    %v447 = vpop.f32.mrf.mxu0
    %v448 = vadd.f32 %v379, %v447
    %v449 = vpop.f32.mrf.mxu0
    %450 = vmatprep.mubr.f32.mxu0 0.0
    %451 = vmatmul.mubr.f32.gmra.mxu0 %v345
    %v452 = vpop.f32.mrf.mxu0
    %v453 = vadd.f32 %v379, %v452
    %v454 = vpop.f32.mrf.mxu0
    %455 = vmatprep.mubr.f32.mxu0 0.0
    %456 = vmatmul.mubr.f32.gmra.mxu0 %v347
    %v457 = vpop.f32.mrf.mxu0
    %v458 = vadd.f32 %v379, %v457
    %v459 = vpop.f32.mrf.mxu0
    %460 = vmatprep.mubr.f32.mxu0 0.0
    %461 = vmatmul.mubr.f32.gmra.mxu0 %v349
    %v462 = vpop.f32.mrf.mxu0
    %v463 = vadd.f32 %v379, %v462
    %v464 = vpop.f32.mrf.mxu0
    %465 = vmatprep.mubr.f32.mxu0 0.0
    %466 = vmatmul.mubr.f32.gmra.mxu0 %v351
    %v467 = vpop.f32.mrf.mxu0
    %v468 = vadd.f32 %v379, %v467
    %v469 = vpop.f32.mrf.mxu0
    %470 = vmatprep.mubr.f32.mxu0 0.0
    %471 = vmatmul.mubr.f32.gmra.mxu0 %v353
    %v472 = vpop.f32.mrf.mxu0
    %v473 = vadd.f32 %v379, %v472
    %v474 = vpop.f32.mrf.mxu0
    %475 = vmatprep.mubr.f32.mxu0 0.0
    %476 = vmatmul.mubr.f32.gmra.mxu0 %v355
    %v477 = vpop.f32.mrf.mxu0
    %v478 = vadd.f32 %v379, %v477
    %v479 = vpop.f32.mrf.mxu0
    %480 = vmatprep.mubr.f32.mxu0 0.0
    %481 = vmatmul.mubr.f32.gmra.mxu0 %v357
    %v482 = vpop.f32.mrf.mxu0
    %v483 = vadd.f32 %v379, %v482
    %v484 = vpop.f32.mrf.mxu0
    %485 = vdwg.mxu0
    %v486 = vxor.u32 %v448, 2147483648
    %v487 = vxor.u32 %v453, 2147483648
    %v488 = vxor.u32 %v458, 2147483648
    %v489 = vxor.u32 %v463, 2147483648
    %v490 = vxor.u32 %v468, 2147483648
    %v491 = vxor.u32 %v473, 2147483648
    %v492 = vxor.u32 %v478, 2147483648
    %v493 = vxor.u32 %v483, 2147483648
    %v494 = vmul.f32 %v486, 1.442695
    %v495 = vpow.pop %v494
    %v496 = vmul.f32 %v487, 1.442695
    %v497 = vpow.pop %v496
    %v498 = vmul.f32 %v488, 1.442695
    %v499 = vpow.pop %v498
    %v500 = vmul.f32 %v489, 1.442695
    %v501 = vpow.pop %v500
    %v502 = vmul.f32 %v490, 1.442695
    %v503 = vpow.pop %v502
    %v504 = vmul.f32 %v491, 1.442695
    %v505 = vpow.pop %v504
    %v506 = vmul.f32 %v492, 1.442695
    %v507 = vpow.pop %v506
    %v508 = vmul.f32 %v493, 1.442695
    %v509 = vpow.pop %v508
    %v510 = vadd.f32 %v495, 1.0
    %v511 = vadd.f32 %v497, 1.0
    %v512 = vadd.f32 %v499, 1.0
    %v513 = vadd.f32 %v501, 1.0
    %v514 = vadd.f32 %v503, 1.0
    %v515 = vadd.f32 %v505, 1.0
    %v516 = vadd.f32 %v507, 1.0
    %v517 = vadd.f32 %v509, 1.0
    %v518 = vrcp.pop %v510
    %v519 = vmul.f32 1.0, %v518
    %v520 = vrcp.pop %v511
    %v521 = vmul.f32 1.0, %v520
    %v522 = vrcp.pop %v512
    %v523 = vmul.f32 1.0, %v522
    %v524 = vrcp.pop %v513
    %v525 = vmul.f32 1.0, %v524
    %v526 = vrcp.pop %v514
    %v527 = vmul.f32 1.0, %v526
    %v528 = vrcp.pop %v515
    %v529 = vmul.f32 1.0, %v528
    %v530 = vrcp.pop %v516
    %v531 = vmul.f32 1.0, %v530
    %v532 = vrcp.pop %v517
    %v533 = vmul.f32 1.0, %v532
    %v534 = vld [vmem:[#allocation2] sm:$0xff]
    %v535 = vld [vmem:[#allocation2 + $0x8] sm:$0xff]
    %v536 = vld [vmem:[#allocation2 + $0x10] sm:$0xff]
    %v537 = vld [vmem:[#allocation2 + $0x18] sm:$0xff]
    %v538 = vld [vmem:[#allocation2 + $0x20] sm:$0xff]
    %v539 = vld [vmem:[#allocation2 + $0x28] sm:$0xff]
    %v540 = vld [vmem:[#allocation2 + $0x30] sm:$0xff]
    %v541 = vld [vmem:[#allocation2 + $0x38] sm:$0xff]
    %v542 = vld [vmem:[#allocation2 + $0x40] sm:$0xff]
    %v543 = vld [vmem:[#allocation2 + $0x48] sm:$0xff]
    %v544 = vld [vmem:[#allocation2 + $0x50] sm:$0xff]
    %v545 = vld [vmem:[#allocation2 + $0x58] sm:$0xff]
    %v546 = vld [vmem:[#allocation2 + $0x60] sm:$0xff]
    %v547 = vld [vmem:[#allocation2 + $0x68] sm:$0xff]
    %v548 = vld [vmem:[#allocation2 + $0x70] sm:$0xff]
    %v549 = vld [vmem:[#allocation2 + $0x78] sm:$0xff]
    %v550 = vld [vmem:[%s6] sm:$0x1]
    %v552 = vlaneseq
    %v553 = vshrl.u32 %v552, 7
    %v554 = vsub.s32 0, %v553
    %v555 = vrot.slane %v550, %v554
    %557 = vmatprep.subr.mxu0 0.0
    %558 = vmatpush1.msra.mxu0 %v549
    %559 = vmatprep.subr.mxu0 0.0
    %560 = vmatpush1.msra.mxu0 %v548
    %561 = vmatprep.subr.mxu0 0.0
    %562 = vmatpush1.msra.mxu0 %v547
    %563 = vmatprep.subr.mxu0 0.0
    %564 = vmatpush1.msra.mxu0 %v546
    %565 = vmatprep.subr.mxu0 0.0
    %566 = vmatpush1.msra.mxu0 %v545
    %567 = vmatprep.subr.mxu0 0.0
    %568 = vmatpush1.msra.mxu0 %v544
    %569 = vmatprep.subr.mxu0 0.0
    %570 = vmatpush1.msra.mxu0 %v543
    %571 = vmatprep.subr.mxu0 0.0
    %572 = vmatpush1.msra.mxu0 %v542
    %573 = vmatprep.subr.mxu0 0.0
    %574 = vmatpush1.msra.mxu0 %v541
    %575 = vmatprep.subr.mxu0 0.0
    %576 = vmatpush1.msra.mxu0 %v540
    %577 = vmatprep.subr.mxu0 0.0
    %578 = vmatpush1.msra.mxu0 %v539
    %579 = vmatprep.subr.mxu0 0.0
    %580 = vmatpush1.msra.mxu0 %v538
    %581 = vmatprep.subr.mxu0 0.0
    %582 = vmatpush1.msra.mxu0 %v537
    %583 = vmatprep.subr.mxu0 0.0
    %584 = vmatpush1.msra.mxu0 %v536
    %585 = vmatprep.subr.mxu0 0.0
    %586 = vmatpush1.msra.mxu0 %v535
    %587 = vmatprep.subr.mxu0 0.0
    %588 = vmatpush1.msra.mxu0 %v534
    %589 = vmatprep.subr.mxu0 0.0
    %590 = vmatpush2.msra.mxu0 0.0
    %591 = vmatprep.subr.mxu0 0.0
    %592 = vmatpush2.msra.mxu0 0.0
    %593 = vmatprep.subr.mxu0 0.0
    %594 = vmatpush2.msra.mxu0 0.0
    %595 = vmatprep.subr.mxu0 0.0
    %596 = vmatpush2.msra.mxu0 0.0
    %597 = vmatprep.subr.mxu0 0.0
    %598 = vmatpush2.msra.mxu0 0.0
    %599 = vmatprep.subr.mxu0 0.0
    %600 = vmatpush2.msra.mxu0 0.0
    %601 = vmatprep.subr.mxu0 0.0
    %602 = vmatpush2.msra.mxu0 0.0
    %603 = vmatprep.subr.mxu0 0.0
    %604 = vmatpush2.msra.mxu0 0.0
    %605 = vmatprep.subr.mxu0 0.0
    %606 = vmatpush2.msra.mxu0 0.0
    %607 = vmatprep.subr.mxu0 0.0
    %608 = vmatpush2.msra.mxu0 0.0
    %609 = vmatprep.subr.mxu0 0.0
    %610 = vmatpush2.msra.mxu0 0.0
    %611 = vmatprep.subr.mxu0 0.0
    %612 = vmatpush2.msra.mxu0 0.0
    %613 = vmatprep.subr.mxu0 0.0
    %614 = vmatpush2.msra.mxu0 0.0
    %615 = vmatprep.subr.mxu0 0.0
    %616 = vmatpush2.msra.mxu0 0.0
    %617 = vmatprep.subr.mxu0 0.0
    %618 = vmatpush2.msra.mxu0 0.0
    %619 = vmatprep.subr.mxu0 0.0
    %620 = vmatpush2.msra.mxu0 0.0
    %621 = vmatprep.mubr.f32.mxu0 0.0
    %622 = vmatmul.mubr.f32.gmra.mxu0 %v519
    %v623 = vpop.f32.mrf.mxu0
    %v624 = vadd.f32 %v555, %v623
    %v625 = vpop.f32.mrf.mxu0
    %626 = vmatprep.mubr.f32.mxu0 0.0
    %627 = vmatmul.mubr.f32.gmra.mxu0 %v521
    %v628 = vpop.f32.mrf.mxu0
    %v629 = vadd.f32 %v555, %v628
    %v630 = vpop.f32.mrf.mxu0
    %631 = vmatprep.mubr.f32.mxu0 0.0
    %632 = vmatmul.mubr.f32.gmra.mxu0 %v523
    %v633 = vpop.f32.mrf.mxu0
    %v634 = vadd.f32 %v555, %v633
    %v635 = vpop.f32.mrf.mxu0
    %636 = vmatprep.mubr.f32.mxu0 0.0
    %637 = vmatmul.mubr.f32.gmra.mxu0 %v525
    %v638 = vpop.f32.mrf.mxu0
    %v639 = vadd.f32 %v555, %v638
    %v640 = vpop.f32.mrf.mxu0
    %641 = vmatprep.mubr.f32.mxu0 0.0
    %642 = vmatmul.mubr.f32.gmra.mxu0 %v527
    %v643 = vpop.f32.mrf.mxu0
    %v644 = vadd.f32 %v555, %v643
    %v645 = vpop.f32.mrf.mxu0
    %646 = vmatprep.mubr.f32.mxu0 0.0
    %647 = vmatmul.mubr.f32.gmra.mxu0 %v529
    %v648 = vpop.f32.mrf.mxu0
    %v649 = vadd.f32 %v555, %v648
    %v650 = vpop.f32.mrf.mxu0
    %651 = vmatprep.mubr.f32.mxu0 0.0
    %652 = vmatmul.mubr.f32.gmra.mxu0 %v531
    %v653 = vpop.f32.mrf.mxu0
    %v654 = vadd.f32 %v555, %v653
    %v655 = vpop.f32.mrf.mxu0
    %656 = vmatprep.mubr.f32.mxu0 0.0
    %657 = vmatmul.mubr.f32.gmra.mxu0 %v533
    %v658 = vpop.f32.mrf.mxu0
    %v659 = vadd.f32 %v555, %v658
    %v660 = vpop.f32.mrf.mxu0
    %661 = vdwg.mxu0
    %v662 = vxor.u32 %v624, 2147483648
    %v663 = vxor.u32 %v629, 2147483648
    %v664 = vxor.u32 %v634, 2147483648
    %v665 = vxor.u32 %v639, 2147483648
    %v666 = vxor.u32 %v644, 2147483648
    %v667 = vxor.u32 %v649, 2147483648
    %v668 = vxor.u32 %v654, 2147483648
    %v669 = vxor.u32 %v659, 2147483648
    %v670 = vmul.f32 %v662, 1.442695
    %v671 = vpow.pop %v670
    %v672 = vmul.f32 %v663, 1.442695
    %v673 = vpow.pop %v672
    %v674 = vmul.f32 %v664, 1.442695
    %v675 = vpow.pop %v674
    %v676 = vmul.f32 %v665, 1.442695
    %v677 = vpow.pop %v676
    %v678 = vmul.f32 %v666, 1.442695
    %v679 = vpow.pop %v678
    %v680 = vmul.f32 %v667, 1.442695
    %v681 = vpow.pop %v680
    %v682 = vmul.f32 %v668, 1.442695
    %v683 = vpow.pop %v682
    %v684 = vmul.f32 %v669, 1.442695
    %v685 = vpow.pop %v684
    %v686 = vadd.f32 %v671, 1.0
    %v687 = vadd.f32 %v673, 1.0
    %v688 = vadd.f32 %v675, 1.0
    %v689 = vadd.f32 %v677, 1.0
    %v690 = vadd.f32 %v679, 1.0
    %v691 = vadd.f32 %v681, 1.0
    %v692 = vadd.f32 %v683, 1.0
    %v693 = vadd.f32 %v685, 1.0
    %v694 = vrcp.pop %v686
    %v695 = vmul.f32 1.0, %v694
    %v696 = vrcp.pop %v687
    %v697 = vmul.f32 1.0, %v696
    %v698 = vrcp.pop %v688
    %v699 = vmul.f32 1.0, %v698
    %v700 = vrcp.pop %v689
    %v701 = vmul.f32 1.0, %v700
    %v702 = vrcp.pop %v690
    %v703 = vmul.f32 1.0, %v702
    %v704 = vrcp.pop %v691
    %v705 = vmul.f32 1.0, %v704
    %v706 = vrcp.pop %v692
    %v707 = vmul.f32 1.0, %v706
    %v708 = vrcp.pop %v693
    %v709 = vmul.f32 1.0, %v708
    %v710 = vpack.c.bf16 %v697, %v695
    %v711 = vpack.c.bf16 %v701, %v699
    %v712 = vpack.c.bf16 %v705, %v703
    %v713 = vpack.c.bf16 %v709, %v707
    %v714 = vld [vmem:[#allocation5] sm:$0xff]
    %v715 = vld [vmem:[#allocation5 + $0x8] sm:$0xff]
    %v716 = vld [vmem:[#allocation5 + $0x10] sm:$0xff]
    %v717 = vld [vmem:[#allocation5 + $0x18] sm:$0xff]
    %v718 = vld [vmem:[#allocation5 + $0x20] sm:$0xff]
    %v719 = vld [vmem:[#allocation5 + $0x28] sm:$0xff]
    %v720 = vld [vmem:[#allocation5 + $0x30] sm:$0xff]
    %v721 = vld [vmem:[#allocation5 + $0x38] sm:$0xff]
    %v722 = vld [vmem:[#allocation5 + $0x40] sm:$0xff]
    %v723 = vld [vmem:[#allocation5 + $0x48] sm:$0xff]
    %v724 = vld [vmem:[#allocation5 + $0x50] sm:$0xff]
    %v725 = vld [vmem:[#allocation5 + $0x58] sm:$0xff]
    %v726 = vld [vmem:[#allocation5 + $0x60] sm:$0xff]
    %v727 = vld [vmem:[#allocation5 + $0x68] sm:$0xff]
    %v728 = vld [vmem:[#allocation5 + $0x70] sm:$0xff]
    %v729 = vld [vmem:[#allocation5 + $0x78] sm:$0xff]
    %v730 = vld [vmem:[%s8] sm:$0x3]
    %v732 = vlaneseq
    %v733 = vshrl.u32 %v732, 7
    %v734 = vsub.s32 0, %v733
    %v735 = vrot.slane %v730, %v734
    %v736 = vlaneseq
    %v737 = vshrl.u32 %v736, 7
    %v738 = vsub.s32 1, %v737
    %v739 = vrot.slane %v730, %v738
    %v758 = vunpack.c.l.b16 %v714
    %v759 = vunpack.c.h.b16 %v714
    %v760 = vunpack.c.l.b16 %v715
    %v761 = vunpack.c.h.b16 %v715
    %v762 = vunpack.c.l.b16 %v716
    %v763 = vunpack.c.h.b16 %v716
    %v764 = vunpack.c.l.b16 %v717
    %v765 = vunpack.c.h.b16 %v717
    %v766 = vunpack.c.l.b16 %v718
    %v767 = vunpack.c.h.b16 %v718
    %v768 = vunpack.c.l.b16 %v719
    %v769 = vunpack.c.h.b16 %v719
    %v770 = vunpack.c.l.b16 %v720
    %v771 = vunpack.c.h.b16 %v720
    %v772 = vunpack.c.l.b16 %v721
    %v773 = vunpack.c.h.b16 %v721
    %v774 = vunpack.c.l.b16 %v722
    %v775 = vunpack.c.h.b16 %v722
    %v776 = vunpack.c.l.b16 %v723
    %v777 = vunpack.c.h.b16 %v723
    %v778 = vunpack.c.l.b16 %v724
    %v779 = vunpack.c.h.b16 %v724
    %v780 = vunpack.c.l.b16 %v725
    %v781 = vunpack.c.h.b16 %v725
    %v782 = vunpack.c.l.b16 %v726
    %v783 = vunpack.c.h.b16 %v726
    %v784 = vunpack.c.l.b16 %v727
    %v785 = vunpack.c.h.b16 %v727
    %v786 = vunpack.c.l.b16 %v728
    %v787 = vunpack.c.h.b16 %v728
    %v788 = vunpack.c.l.b16 %v729
    %v789 = vunpack.c.h.b16 %v729
    %v790 = vpack.c.b16 %v760, %v758
    %v791 = vpack.c.b16 %v761, %v759
    %v792 = vpack.c.b16 %v764, %v762
    %v793 = vpack.c.b16 %v765, %v763
    %v794 = vpack.c.b16 %v768, %v766
    %v795 = vpack.c.b16 %v769, %v767
    %v796 = vpack.c.b16 %v772, %v770
    %v797 = vpack.c.b16 %v773, %v771
    %v798 = vpack.c.b16 %v776, %v774
    %v799 = vpack.c.b16 %v777, %v775
    %v800 = vpack.c.b16 %v780, %v778
    %v801 = vpack.c.b16 %v781, %v779
    %v802 = vpack.c.b16 %v784, %v782
    %v803 = vpack.c.b16 %v785, %v783
    %v804 = vpack.c.b16 %v788, %v786
    %v805 = vpack.c.b16 %v789, %v787
    %822 = vmatprep.subr.bf16.mxu0 %v805
    %823 = vmatpush1.bf16.msra.mxu0 %v804
    %824 = vmatprep.subr.bf16.mxu0 %v803
    %825 = vmatpush1.bf16.msra.mxu0 %v802
    %826 = vmatprep.subr.bf16.mxu0 %v801
    %827 = vmatpush1.bf16.msra.mxu0 %v800
    %828 = vmatprep.subr.bf16.mxu0 %v799
    %829 = vmatpush1.bf16.msra.mxu0 %v798
    %830 = vmatprep.subr.bf16.mxu0 %v797
    %831 = vmatpush1.bf16.msra.mxu0 %v796
    %832 = vmatprep.subr.bf16.mxu0 %v795
    %833 = vmatpush1.bf16.msra.mxu0 %v794
    %834 = vmatprep.subr.bf16.mxu0 %v793
    %835 = vmatpush1.bf16.msra.mxu0 %v792
    %836 = vmatprep.subr.bf16.mxu0 %v791
    %837 = vmatpush1.bf16.msra.mxu0 %v790
    %838 = vmatprep.subr.bf16.mxu0 0
    %839 = vmatpush2.bf16.msra.mxu0 0
    %840 = vmatprep.subr.bf16.mxu0 0
    %841 = vmatpush2.bf16.msra.mxu0 0
    %842 = vmatprep.subr.bf16.mxu0 0
    %843 = vmatpush2.bf16.msra.mxu0 0
    %844 = vmatprep.subr.bf16.mxu0 0
    %845 = vmatpush2.bf16.msra.mxu0 0
    %846 = vmatprep.subr.bf16.mxu0 0
    %847 = vmatpush2.bf16.msra.mxu0 0
    %848 = vmatprep.subr.bf16.mxu0 0
    %849 = vmatpush2.bf16.msra.mxu0 0
    %850 = vmatprep.subr.bf16.mxu0 0
    %851 = vmatpush2.bf16.msra.mxu0 0
    %852 = vmatprep.subr.bf16.mxu0 0
    %853 = vmatpush2.bf16.msra.mxu0 0
    %854 = vmatprep.mubr.bf16.mxu0 0
    %855 = vmatmul.mubr.bf16.gmra.mxu0 %v710
    %v856 = vpop.f32.mrf.mxu0
    %v857 = vadd.f32 %v735, %v856
    %v858 = vpop.f32.mrf.mxu0
    %v859 = vadd.f32 %v739, %v858
    %v860 = vpop.f32.mrf.mxu0
    %v861 = vadd.f32 %v735, %v860
    %v862 = vpop.f32.mrf.mxu0
    %v863 = vadd.f32 %v739, %v862
    %864 = vmatprep.mubr.bf16.mxu0 0
    %865 = vmatmul.mubr.bf16.gmra.mxu0 %v711
    %v866 = vpop.f32.mrf.mxu0
    %v867 = vadd.f32 %v735, %v866
    %v868 = vpop.f32.mrf.mxu0
    %v869 = vadd.f32 %v739, %v868
    %v870 = vpop.f32.mrf.mxu0
    %v871 = vadd.f32 %v735, %v870
    %v872 = vpop.f32.mrf.mxu0
    %v873 = vadd.f32 %v739, %v872
    %874 = vmatprep.mubr.bf16.mxu0 0
    %875 = vmatmul.mubr.bf16.gmra.mxu0 %v712
    %v876 = vpop.f32.mrf.mxu0
    %v877 = vadd.f32 %v735, %v876
    %v878 = vpop.f32.mrf.mxu0
    %v879 = vadd.f32 %v739, %v878
    %v880 = vpop.f32.mrf.mxu0
    %v881 = vadd.f32 %v735, %v880
    %v882 = vpop.f32.mrf.mxu0
    %v883 = vadd.f32 %v739, %v882
    %884 = vmatprep.mubr.bf16.mxu0 0
    %885 = vmatmul.mubr.bf16.gmra.mxu0 %v713
    %v886 = vpop.f32.mrf.mxu0
    %v887 = vadd.f32 %v735, %v886
    %v888 = vpop.f32.mrf.mxu0
    %v889 = vadd.f32 %v739, %v888
    %v890 = vpop.f32.mrf.mxu0
    %v891 = vadd.f32 %v735, %v890
    %v892 = vpop.f32.mrf.mxu0
    %v893 = vadd.f32 %v739, %v892
    %894 = vdwg.mxu0
    %v895 = vpack.c.bf16 %v861, %v857
    %v896 = vpack.c.bf16 %v863, %v859
    %v897 = vpack.c.bf16 %v871, %v867
    %v898 = vpack.c.bf16 %v873, %v869
    %v899 = vpack.c.bf16 %v881, %v877
    %v900 = vpack.c.bf16 %v883, %v879
    %v901 = vpack.c.bf16 %v891, %v887
    %v902 = vpack.c.bf16 %v893, %v889
    %v911 = vunpack.c.l.b16 %v895
    %v912 = vunpack.c.l.b16 %v896
    %v913 = vunpack.c.h.b16 %v895
    %v914 = vunpack.c.h.b16 %v896
    %v915 = vunpack.c.l.b16 %v897
    %v916 = vunpack.c.l.b16 %v898
    %v917 = vunpack.c.h.b16 %v897
    %v918 = vunpack.c.h.b16 %v898
    %v919 = vunpack.c.l.b16 %v899
    %v920 = vunpack.c.l.b16 %v900
    %v921 = vunpack.c.h.b16 %v899
    %v922 = vunpack.c.h.b16 %v900
    %v923 = vunpack.c.l.b16 %v901
    %v924 = vunpack.c.l.b16 %v902
    %v925 = vunpack.c.h.b16 %v901
    %v926 = vunpack.c.h.b16 %v902
    %v927 = vpack.c.b16 %v912, %v911
    %v928 = vpack.c.b16 %v914, %v913
    %v929 = vpack.c.b16 %v916, %v915
    %v930 = vpack.c.b16 %v918, %v917
    %v931 = vpack.c.b16 %v920, %v919
    %v932 = vpack.c.b16 %v922, %v921
    %v933 = vpack.c.b16 %v924, %v923
    %v934 = vpack.c.b16 %v926, %v925
    %943 = vst [vmem:[#allocation7] sm:$0xff] %v927
    %944 = vst [vmem:[#allocation7 + $0x8] sm:$0xff] %v928
    %945 = vst [vmem:[#allocation7 + $0x10] sm:$0xff] %v929
    %946 = vst [vmem:[#allocation7 + $0x18] sm:$0xff] %v930
    %947 = vst [vmem:[#allocation7 + $0x20] sm:$0xff] %v931
    %948 = vst [vmem:[#allocation7 + $0x28] sm:$0xff] %v932
    %949 = vst [vmem:[#allocation7 + $0x30] sm:$0xff] %v933
    %950 = vst [vmem:[#allocation7 + $0x38] sm:$0xff] %v934
    // Predicated region
    $region46: #{_sae_apply.1} parent=1 // pred_check
      _
    $region47: #{_sae_apply.1} parent=1 // pred_check_branch
      %952 = sbr.rel (0) target = $region49
    $region48: #{_sae_apply.1} parent=1 // pred_region
      %s954 = ssub.s32 1024, 1024
      %955 = vsyncadd [#allocation4], %s954
      %s956 = sshll.u32 [#allocation7], 4
      %s957 = int_to_ptr.vmem [resolvable:$true] %s956
      %962 = dma.vmem_to_hbm [thread:$0]  %s957, 1024, %s9, [#allocation4], 128, 128, 8
    $region49: #{_sae_apply.1} parent=1 // pred_fallthru
      _
    // Predicated region
    $region50: #{_sae_apply.1} parent=1 // pred_check
      _
    $region51: #{_sae_apply.1} parent=1 // pred_check_branch
      %964 = sbr.rel (0) target = $region53
    $region52: #{_sae_apply.1} parent=1 // pred_region
      %965 = dma.done [#allocation4], 1024
    $region53: #{_sae_apply.1} parent=1 // pred_fallthru
      _
    %966 = vsyncpa [#allocation3], 1
    %967 = vsyncpa [#allocation6], 1
    %968 = vsyncpa [#allocation4], 1

</llo_original>
